<compile_context>
chip_gen: v7x
topology: tpu7x:2x2x1
jax: 0.10.0
libtpu: 0.0.40
codegen_flags: <defaults>
</compile_context>

<pallas_src>
import jax
import jax.numpy as jnp
from jax.experimental import pallas as pl
from jax.experimental.pallas import tpu as pltpu

_LANES = 128
_TARGET_BLOCK_BYTES = 4 * 1024 * 1024   # ~4 MiB input block for large tensors
_MIN_BLOCK_BYTES = 1 * 1024 * 1024      # mid-size floor: ~1 MiB block
_VMEM_LIMIT_BYTES = 32 * 1024 * 1024    # 4x block (in+out, double-buffered) + headroom
_MIN_GRID_STEPS = 2                     # one block per TensorCore on v7x


def _round_up(v: int, m: int) -> int:
    return ((v + m - 1) // m) * m


def _sublane_multiple(dtype) -> int:
    """Sublane packing multiple: 8 for 32-bit, 16 for 16-bit, 32 for 8-bit."""
    itemsize = jnp.dtype(dtype).itemsize
    return max(8, 32 // itemsize)


def _clamp_exp_kernel(x_ref, o_ref):
    x = x_ref[...]
    zero = jnp.zeros((), dtype=x.dtype)
    # min(exp(x), 1) == exp(min(x, 0)); avoids inf intermediates.
    o_ref[...] = jnp.exp(jnp.minimum(x, zero))


def clamp_exp(x: jax.Array, *, donate: bool = False) -> jax.Array:
    """min(exp(x), 1), elementwise, computed in a Pallas TPU kernel."""
    orig_shape = x.shape
    dtype = x.dtype
    n = x.size
    if n == 0:
        return x

    itemsize = jnp.dtype(dtype).itemsize
    mult = _sublane_multiple(dtype)
    row_bytes = _LANES * itemsize

    x_flat = x.reshape(-1)
    rem = n % _LANES
    n_main = n - rem

    # Non-lane-aligned tail (<= 127 elements): plain jnp, no whole-array copy.
    tail_out = None
    if rem:
        tail = x_flat[n_main:]
        tail_out = jnp.exp(jnp.minimum(tail, jnp.zeros((), dtype=dtype)))

    if n_main == 0:
        out_flat = tail_out
    else:
        rows = n_main // _LANES
        x2d = x_flat[:n_main].reshape(rows, _LANES)

        # Tile-row selection (Python ints at trace time):
        #  * large tensors: ~4 MiB blocks, many grid steps.
        #  * mid tensors: shrink so the grid keeps >= 2 steps, never below
        #    ~1 MiB blocks (amortizes the ~0.35 us per-step overhead).
        #  * tiny tensors: one full-array block (always a legal block shape).
        tile_rows = _round_up(max(mult, _TARGET_BLOCK_BYTES // row_bytes), mult)
        floor_rows = _round_up(max(mult, _MIN_BLOCK_BYTES // row_bytes), mult)
        tr = min(
            tile_rows,
            max(floor_rows, _round_up(pl.cdiv(rows, _MIN_GRID_STEPS), mult)),
        )
        if rows <= tr:
            tr = rows  # single full-array block
        grid = (pl.cdiv(rows, tr),)

        out2d = pl.pallas_call(
            _clamp_exp_kernel,
            out_shape=jax.ShapeDtypeStruct((rows, _LANES), dtype),
            grid=grid,
            in_specs=[pl.BlockSpec((tr, _LANES), lambda i: (i, 0))],
            out_specs=pl.BlockSpec((tr, _LANES), lambda i: (i, 0)),
            compiler_params=pltpu.CompilerParams(
                dimension_semantics=("parallel",),
                vmem_limit_bytes=_VMEM_LIMIT_BYTES,
            ),
            cost_estimate=pl.CostEstimate(
                flops=n_main,
                transcendentals=n_main,
                bytes_accessed=2 * n_main * itemsize,
            ),
            input_output_aliases=({0: 0} if donate else {}),
        )(x2d)

        out_main = out2d.reshape(-1)
        out_flat = out_main if tail_out is None else jnp.concatenate(
            [out_main, tail_out]
        )

    return out_flat.reshape(orig_shape)


if __name__ == "__main__":
    key = jax.random.PRNGKey(0)

    # Primary check: small NCHW input typical for ClampExp usage.
    x = jax.random.normal(key, (2, 4, 16, 16), dtype=jnp.float32)
    y = clamp_exp(x)
    jax.block_until_ready(y)
    y_ref = jnp.minimum(jnp.exp(x), 1.0)
    assert y.shape == x.shape and y.dtype == x.dtype
    assert jnp.allclose(y, y_ref, rtol=1e-6, atol=1e-6)

    # Secondary check: lane-aligned size exercising the single-large-block path.
    k1, k2 = jax.random.split(key)
    x2 = jax.random.normal(k1, (1, 8, 100, 128), dtype=jnp.float32) * 3.0
    y2 = clamp_exp(x2)
    jax.block_until_ready(y2)
    assert jnp.allclose(y2, jnp.minimum(jnp.exp(x2), 1.0), rtol=1e-6, atol=1e-6)

    # Tertiary check: non-lane-aligned element count (jnp tail path, no padding copies).
    x3 = jax.random.normal(k2, (3, 5, 7), dtype=jnp.float32)
    y3 = clamp_exp(x3)
    jax.block_until_ready(y3)
    assert jnp.allclose(y3, jnp.minimum(jnp.exp(x3), 1.0), rtol=1e-6, atol=1e-6)

    print("KERNEL_OK")
</pallas_src>

<mosaic_0001>
module attributes {stable_mosaic.version = 11 : i64} {
  func.func @_clamp_exp_kernel(%arg0: i32, %arg1: memref<16x128xf32, #tpu.memory_space<vmem>>, %arg2: memref<16x128xf32, #tpu.memory_space<vmem>>) attributes {dimension_semantics = [#tpu.dimension_semantics<parallel>], iteration_bounds = array<i64: 1>, scalar_prefetch = 0 : i64, scratch_operands = 0 : i64, tpu.core_type = #tpu.core_type<tc>, window_params = [{transform_indices = @transform_0, window_bounds = array<i64: 16, 128>}, {transform_indices = @transform_1, window_bounds = array<i64: 16, 128>}]} {
    %c0 = arith.constant 0 : index
    %c0_0 = arith.constant 0 : index
    %0 = vector.load %arg1[%c0, %c0_0] : memref<16x128xf32, #tpu.memory_space<vmem>>, vector<16x128xf32>
    %cst = arith.constant 0.000000e+00 : f32
    %1 = vector.broadcast %cst : f32 to vector<16x128xf32>
    %2 = arith.minimumf %0, %1 : vector<16x128xf32>
    %3 = math.exp %2 : vector<16x128xf32>
    %c0_1 = arith.constant 0 : index
    %c0_2 = arith.constant 0 : index
    %4 = vector.load %arg2[%c0_1, %c0_2] : memref<16x128xf32, #tpu.memory_space<vmem>>, vector<16x128xf32>
    tpu.vector_store %arg2[%c0_1, %c0_2], %3 {strides = array<i32>} : memref<16x128xf32, #tpu.memory_space<vmem>>, vector<16x128xf32>,
    return
  }
  func.func @transform_0(%arg0: i32) -> (i32, i32) {
    %c0_i32 = arith.constant 0 : i32
    %c0_i32_0 = arith.constant 0 : i32
    return %arg0, %c0_i32 : i32, i32
  }
  func.func @transform_1(%arg0: i32) -> (i32, i32) {
    %c0_i32 = arith.constant 0 : i32
    %c0_i32_0 = arith.constant 0 : i32
    return %arg0, %c0_i32 : i32, i32
  }
}

</mosaic_0001>

<llo_original>
// kernel: tpu_custom_call.1
$region0: #{tpu_custom_call.1}
  #allocation0 [shape = 'u32[]', space=smem, size = 0x4, offset = 0x4, fixed_abs, tag = 'smem constant byte address 0x4 - core index']
  #allocation1 [shape = 'u32[144,128]{1,0:T(1,128)}', space=vmem, size = 0x12000, scoped, tag = 'internal scratch']
  %s0 = inlined_call_operand.hbm [shape: f32[16,128], index: 0, kind: input, shape index: {}]
  %s1 = inlined_call_operand.hbm [shape: f32[16,128], index: 1, kind: output, shape index: {}]
  %s2 = sld [smem:[#allocation0]]
  $region18: #{tpu_custom_call.1} parent=0
    _
  %s4 = ssub.s32 1, %s2
  %s5 = scalar_select 0, %s4, %s2
  $region1: #{tpu_custom_call.1} parent=0
    #allocation2 [shape = 'u8[8192]{0}', space=vmem, size = 0x2000, scoped, tag = 'input window, operand 0, single buffered']
    #allocation3 [shape = 's32[1]{0}', space=sflag, size = 0x4, scoped, tag = 'scoped memory for tpu_custom_call.1']
    #allocation4 [shape = 's32[1]{0}', space=sflag, size = 0x4, scoped, tag = 'scoped memory for tpu_custom_call.1']
    #allocation5 [shape = 'u8[8192]{0}', space=vmem, size = 0x2000, scoped, tag = 'output window, operand 0, single buffered']
    %6 = vsyncpa [#allocation3], 0
    %7 = vsyncpa [#allocation4], 0
    // Predicated region
    $region2: #{tpu_custom_call.1} parent=1 // pred_check
      _
    $region3: #{tpu_custom_call.1} parent=1 // pred_check_branch
      %9 = sbr.rel (0) target = $region5
    $region4: #{tpu_custom_call.1} parent=1 // pred_region
      %s11 = ssub.s32 256, 256
      %12 = vsyncadd [#allocation3], %s11
      %s13 = sshll.u32 [#allocation2], 4
      %s14 = int_to_ptr.vmem [resolvable:$true] %s13
      %19 = dma.hbm_to_vmem [thread:$0]  %s0, 256, %s14, [#allocation3], 128, 128, 8
    $region5: #{tpu_custom_call.1} parent=1 // pred_fallthru
      _
    // Predicated region
    $region6: #{tpu_custom_call.1} parent=1 // pred_check
      _
    $region7: #{tpu_custom_call.1} parent=1 // pred_check_branch
      %21 = sbr.rel (0) target = $region9
    $region8: #{tpu_custom_call.1} parent=1 // pred_region
      %22 = dma.done [#allocation3], 256
    $region9: #{tpu_custom_call.1} parent=1 // pred_fallthru
      _
    %v23 = vld [vmem:[#allocation2] sm:$0xff]
    %v24 = vld [vmem:[#allocation2 + $0x8] sm:$0xff]
    %v25 = vmin.f32 %v23, 0.0
    %v26 = vmin.f32 %v24, 0.0
    %v27 = vmul.f32 %v25, 1.442695
    %v28 = vpow.pop %v27
    %v29 = vmul.f32 %v26, 1.442695
    %v30 = vpow.pop %v29
    %31 = vst [vmem:[#allocation5] sm:$0xff] %v28
    %32 = vst [vmem:[#allocation5 + $0x8] sm:$0xff] %v30
    // Predicated region
    $region10: #{tpu_custom_call.1} parent=1 // pred_check
      _
    $region11: #{tpu_custom_call.1} parent=1 // pred_check_branch
      %34 = sbr.rel (0) target = $region13
    $region12: #{tpu_custom_call.1} parent=1 // pred_region
      %s36 = ssub.s32 256, 256
      %37 = vsyncadd [#allocation4], %s36
      %s38 = sshll.u32 [#allocation5], 4
      %s39 = int_to_ptr.vmem [resolvable:$true] %s38
      %44 = dma.vmem_to_hbm [thread:$0]  %s39, 256, %s1, [#allocation4], 128, 128, 8
    $region13: #{tpu_custom_call.1} parent=1 // pred_fallthru
      _
    // Predicated region
    $region14: #{tpu_custom_call.1} parent=1 // pred_check
      _
    $region15: #{tpu_custom_call.1} parent=1 // pred_check_branch
      %46 = sbr.rel (0) target = $region17
    $region16: #{tpu_custom_call.1} parent=1 // pred_region
      %47 = dma.done [#allocation4], 256
    $region17: #{tpu_custom_call.1} parent=1 // pred_fallthru
      _
    %48 = vsyncpa [#allocation3], 1
    %49 = vsyncpa [#allocation4], 1

</llo_original>
